<compile_context>
chip_gen: v7x
topology: tpu7x:2x2x1
jax: 0.10.0
libtpu: 0.0.40
codegen_flags: <defaults>
</compile_context>

<pallas_src>
import functools

import jax
import jax.numpy as jnp
from jax.experimental import pallas as pl
from jax.experimental.pallas import tpu as pltpu


_BLOCK_BYTES_BUDGET = 4 << 20  # per-operand per-block VMEM budget (~4 MiB)


def _coloss_kernel(pred_ref, gt_ref, out_ref,
                   main_acc, trans_acc, co_acc,
                   *, lambda1, lambda2, n_elems):
    step = pl.program_id(0)

    @pl.when(step == 0)
    def _init():
        main_acc[...] = jnp.zeros_like(main_acc)
        trans_acc[...] = jnp.zeros_like(trans_acc)
        co_acc[...] = jnp.zeros_like(co_acc)

    # Split channels via static indexing on a leading dim (no data movement).
    pm = pred_ref[:, 0, :, :].astype(jnp.float32)   # (block_b, H, W)
    pt = pred_ref[:, 1, :, :].astype(jnp.float32)
    gm = gt_ref[:, 0, :, :].astype(jnp.float32)
    gt = gt_ref[:, 1, :, :].astype(jnp.float32)

    def smooth_l1(x, y):
        # PyTorch SmoothL1Loss, beta = 1.0 (default), per-element.
        d = jnp.abs(x - y)
        return jnp.where(d < 1.0, 0.5 * d * d, d - 0.5)

    main_acc[...] = main_acc[...] + jnp.sum(smooth_l1(pm, gm))
    trans_acc[...] = trans_acc[...] + jnp.sum(smooth_l1(pt, gt))

    # pred_trans / (gt_trans / gt_main), rewritten with a single divide.
    diff = pt * gm / gt - pm
    co_acc[...] = co_acc[...] + jnp.sum(diff * diff)

    @pl.when(step == pl.num_programs(0) - 1)
    def _finalize():
        inv_n = 1.0 / jnp.float32(n_elems)
        main_loss = main_acc[...] * inv_n    # (1, 1)
        trans_loss = trans_acc[...] * inv_n  # (1, 1)
        co_loss_ = co_acc[...] * inv_n       # (1, 1)
        out_ref[...] = (main_loss * (1.0 - lambda1 - lambda2)
                        + trans_loss * lambda1
                        + co_loss_ * lambda2)


def co_loss(pred_group, gt_group, lambda1=0.3, lambda2=0.2):
    B, G, H, W = pred_group.shape
    assert G == 2, "CoLoss expects exactly 2 streams along dim 1"
    assert gt_group.shape == pred_group.shape

    n = B * H * W  # mean denominator per loss term

    # Pick block_b as a divisor of B so the grid covers B exactly (no padding,
    # no tail masking) while keeping each operand's block under the budget.
    itemsize = jnp.dtype(pred_group.dtype).itemsize
    per_batch_bytes = 2 * H * W * itemsize
    block_b = max(1, min(B, _BLOCK_BYTES_BUDGET // max(per_batch_bytes, 1)))
    while B % block_b:
        block_b -= 1
    grid = B // block_b

    kernel = functools.partial(
        _coloss_kernel,
        lambda1=float(lambda1),
        lambda2=float(lambda2),
        n_elems=n,
    )

    # Last two block dims equal the full array dims -> valid for any H, W.
    in_blk = pl.BlockSpec((block_b, 2, H, W), lambda i: (i, 0, 0, 0))
    out = pl.pallas_call(
        kernel,
        out_shape=jax.ShapeDtypeStruct((1, 1), jnp.float32),
        grid_spec=pltpu.PrefetchScalarGridSpec(
            num_scalar_prefetch=0,
            grid=(grid,),
            in_specs=[in_blk, in_blk],
            out_specs=pl.BlockSpec((1, 1), lambda i: (0, 0)),
            scratch_shapes=[
                pltpu.VMEM((1, 1), jnp.float32),  # main partial sum
                pltpu.VMEM((1, 1), jnp.float32),  # trans partial sum
                pltpu.VMEM((1, 1), jnp.float32),  # co partial sum
            ],
        ),
        compiler_params=pltpu.CompilerParams(
            dimension_semantics=("arbitrary",),  # grid axis is a reduction
            vmem_limit_bytes=32 << 20,           # safe on v5e/v6e/v7x
        ),
    )(pred_group, gt_group)
    return out[0, 0]


def co_loss_ref(pred_group, gt_group, lambda1=0.3, lambda2=0.2):
    """Pure-JAX reference matching the PyTorch module."""
    pred_main = pred_group[:, 0].astype(jnp.float32)
    pred_trans = pred_group[:, 1].astype(jnp.float32)
    gt_main = gt_group[:, 0].astype(jnp.float32)
    gt_trans = gt_group[:, 1].astype(jnp.float32)

    def smooth_l1(x, y):
        d = jnp.abs(x - y)
        return jnp.mean(jnp.where(d < 1.0, 0.5 * d * d, d - 0.5))

    main_loss = smooth_l1(pred_main, gt_main)
    trans_loss = smooth_l1(pred_trans, gt_trans)
    pred_trans_rev = pred_trans / (gt_trans / gt_main)
    co_loss_ = jnp.mean((pred_trans_rev - pred_main) ** 2)
    return (main_loss * (1.0 - lambda1 - lambda2)
            + trans_loss * lambda1
            + co_loss_ * lambda2)


if __name__ == "__main__":
    # Small deterministic example: batch=2, 2 streams, 16x16 spatial.
    key = jax.random.PRNGKey(0)
    k_pred, k_gt = jax.random.split(key)

    B, G, H, W = 2, 2, 16, 16
    pred_group = jax.random.normal(k_pred, (B, G, H, W), dtype=jnp.float32)
    # Keep gt bounded away from zero so gt_trans / gt_main is well-behaved.
    gt_group = jax.random.uniform(k_gt, (B, G, H, W), dtype=jnp.float32,
                                  minval=0.5, maxval=1.5)

    loss = co_loss(pred_group, gt_group)
    loss = jax.block_until_ready(loss)

    ref = co_loss_ref(pred_group, gt_group)
    assert jnp.allclose(loss, ref, rtol=1e-5, atol=1e-5), (loss, ref)

    print("KERNEL_OK")
</pallas_src>

<mosaic_0001>
module attributes {stable_mosaic.version = 11 : i64} {
  func.func @_coloss_kernel(%arg0: i32, %arg1: memref<2x2x16x16xf32, #tpu.memory_space<vmem>>, %arg2: memref<2x2x16x16xf32, #tpu.memory_space<vmem>>, %arg3: memref<1x1xf32, #tpu.memory_space<vmem>>, %arg4: memref<1x1xf32, #tpu.memory_space<vmem>>, %arg5: memref<1x1xf32, #tpu.memory_space<vmem>>, %arg6: memref<1x1xf32, #tpu.memory_space<vmem>>) attributes {dimension_semantics = [#tpu.dimension_semantics<arbitrary>], iteration_bounds = array<i64: 1>, scalar_prefetch = 0 : i64, scratch_operands = 3 : i64, tpu.core_type = #tpu.core_type<tc>, window_params = [{transform_indices = @transform_0, window_bounds = array<i64: 2, 2, 16, 16>}, {transform_indices = @transform_1, window_bounds = array<i64: 2, 2, 16, 16>}, {pipeline_mode = #tpu.pipeline_mode<synchronous>, transform_indices = @transform_2, window_bounds = array<i64: 1, 1>}]} {
    %c0_i32 = arith.constant 0 : i32
    %0 = arith.cmpi eq, %arg0, %c0_i32 : i32
    %1 = arith.extui %0 : i1 to i32
    %c0_i32_0 = arith.constant 0 : i32
    %2 = arith.cmpi ne, %1, %c0_i32_0 : i32
    scf.if %2 {
      %cst_37 = arith.constant 0.000000e+00 : f32
      %62 = vector.broadcast %cst_37 : f32 to vector<1x1xf32>
      %c0_38 = arith.constant 0 : index
      %c0_39 = arith.constant 0 : index
      %63 = vector.load %arg4[%c0_38, %c0_39] : memref<1x1xf32, #tpu.memory_space<vmem>>, vector<1x1xf32>
      tpu.vector_store %arg4[%c0_38, %c0_39], %62 {strides = array<i32>} : memref<1x1xf32, #tpu.memory_space<vmem>>, vector<1x1xf32>,
      %cst_40 = arith.constant 0.000000e+00 : f32
      %64 = vector.broadcast %cst_40 : f32 to vector<1x1xf32>
      %c0_41 = arith.constant 0 : index
      %c0_42 = arith.constant 0 : index
      %65 = vector.load %arg5[%c0_41, %c0_42] : memref<1x1xf32, #tpu.memory_space<vmem>>, vector<1x1xf32>
      tpu.vector_store %arg5[%c0_41, %c0_42], %64 {strides = array<i32>} : memref<1x1xf32, #tpu.memory_space<vmem>>, vector<1x1xf32>,
      %cst_43 = arith.constant 0.000000e+00 : f32
      %66 = vector.broadcast %cst_43 : f32 to vector<1x1xf32>
      %c0_44 = arith.constant 0 : index
      %c0_45 = arith.constant 0 : index
      %67 = vector.load %arg6[%c0_44, %c0_45] : memref<1x1xf32, #tpu.memory_space<vmem>>, vector<1x1xf32>
      tpu.vector_store %arg6[%c0_44, %c0_45], %66 {strides = array<i32>} : memref<1x1xf32, #tpu.memory_space<vmem>>, vector<1x1xf32>,
    } else {
    }
    %c0 = arith.constant 0 : index
    %c0_1 = arith.constant 0 : index
    %c0_2 = arith.constant 0 : index
    %c0_3 = arith.constant 0 : index
    %3 = vector.load %arg1[%c0, %c0_1, %c0_2, %c0_3] : memref<2x2x16x16xf32, #tpu.memory_space<vmem>>, vector<2x1x16x16xf32>
    %4 = vector.shape_cast %3 : vector<2x1x16x16xf32> to vector<2x16x16xf32>
    %c0_4 = arith.constant 0 : index
    %c1 = arith.constant 1 : index
    %c0_5 = arith.constant 0 : index
    %c0_6 = arith.constant 0 : index
    %5 = vector.load %arg1[%c0_4, %c1, %c0_5, %c0_6] : memref<2x2x16x16xf32, #tpu.memory_space<vmem>>, vector<2x1x16x16xf32>
    %6 = vector.shape_cast %5 : vector<2x1x16x16xf32> to vector<2x16x16xf32>
    %c0_7 = arith.constant 0 : index
    %c0_8 = arith.constant 0 : index
    %c0_9 = arith.constant 0 : index
    %c0_10 = arith.constant 0 : index
    %7 = vector.load %arg2[%c0_7, %c0_8, %c0_9, %c0_10] : memref<2x2x16x16xf32, #tpu.memory_space<vmem>>, vector<2x1x16x16xf32>
    %8 = vector.shape_cast %7 : vector<2x1x16x16xf32> to vector<2x16x16xf32>
    %c0_11 = arith.constant 0 : index
    %c1_12 = arith.constant 1 : index
    %c0_13 = arith.constant 0 : index
    %c0_14 = arith.constant 0 : index
    %9 = vector.load %arg2[%c0_11, %c1_12, %c0_13, %c0_14] : memref<2x2x16x16xf32, #tpu.memory_space<vmem>>, vector<2x1x16x16xf32>
    %10 = vector.shape_cast %9 : vector<2x1x16x16xf32> to vector<2x16x16xf32>
    %c0_15 = arith.constant 0 : index
    %c0_16 = arith.constant 0 : index
    %11 = vector.load %arg4[%c0_15, %c0_16] : memref<1x1xf32, #tpu.memory_space<vmem>>, vector<1x1xf32>
    %12 = arith.subf %4, %8 : vector<2x16x16xf32>
    %13 = math.absf %12 : vector<2x16x16xf32>
    %cst = arith.constant 1.000000e+00 : f32
    %14 = vector.broadcast %cst : f32 to vector<2x16x16xf32>
    %15 = arith.cmpf olt, %13, %14 : vector<2x16x16xf32>
    %cst_17 = arith.constant 5.000000e-01 : f32
    %16 = vector.broadcast %cst_17 : f32 to vector<2x16x16xf32>
    %17 = arith.mulf %16, %13 : vector<2x16x16xf32>
    %18 = arith.mulf %17, %13 : vector<2x16x16xf32>
    %cst_18 = arith.constant 5.000000e-01 : f32
    %19 = vector.broadcast %cst_18 : f32 to vector<2x16x16xf32>
    %20 = arith.subf %13, %19 : vector<2x16x16xf32>
    %21 = arith.select %15, %18, %20 : vector<2x16x16xi1>, vector<2x16x16xf32>
    %22 = vector.shape_cast %21 : vector<2x16x16xf32> to vector<1x2x16x16xf32>
    %cst_19 = arith.constant dense<0.000000e+00> : vector<1xf32>
    %23 = vector.multi_reduction <add>, %22, %cst_19 [1, 2, 3] : vector<1x2x16x16xf32> to vector<1xf32>
    %24 = vector.shape_cast %23 : vector<1xf32> to vector<1x1x1x1xf32>
    %25 = vector.extract %24[0, 0, 0, 0] : f32 from vector<1x1x1x1xf32>
    %26 = vector.broadcast %25 : f32 to vector<1x1xf32>
    %27 = arith.addf %11, %26 : vector<1x1xf32>
    %c0_20 = arith.constant 0 : index
    %c0_21 = arith.constant 0 : index
    %28 = vector.load %arg4[%c0_20, %c0_21] : memref<1x1xf32, #tpu.memory_space<vmem>>, vector<1x1xf32>
    tpu.vector_store %arg4[%c0_20, %c0_21], %27 {strides = array<i32>} : memref<1x1xf32, #tpu.memory_space<vmem>>, vector<1x1xf32>,
    %c0_22 = arith.constant 0 : index
    %c0_23 = arith.constant 0 : index
    %29 = vector.load %arg5[%c0_22, %c0_23] : memref<1x1xf32, #tpu.memory_space<vmem>>, vector<1x1xf32>
    %30 = arith.subf %6, %10 : vector<2x16x16xf32>
    %31 = math.absf %30 : vector<2x16x16xf32>
    %cst_24 = arith.constant 1.000000e+00 : f32
    %32 = vector.broadcast %cst_24 : f32 to vector<2x16x16xf32>
    %33 = arith.cmpf olt, %31, %32 : vector<2x16x16xf32>
    %cst_25 = arith.constant 5.000000e-01 : f32
    %34 = vector.broadcast %cst_25 : f32 to vector<2x16x16xf32>
    %35 = arith.mulf %34, %31 : vector<2x16x16xf32>
    %36 = arith.mulf %35, %31 : vector<2x16x16xf32>
    %cst_26 = arith.constant 5.000000e-01 : f32
    %37 = vector.broadcast %cst_26 : f32 to vector<2x16x16xf32>
    %38 = arith.subf %31, %37 : vector<2x16x16xf32>
    %39 = arith.select %33, %36, %38 : vector<2x16x16xi1>, vector<2x16x16xf32>
    %40 = vector.shape_cast %39 : vector<2x16x16xf32> to vector<1x2x16x16xf32>
    %cst_27 = arith.constant dense<0.000000e+00> : vector<1xf32>
    %41 = vector.multi_reduction <add>, %40, %cst_27 [1, 2, 3] : vector<1x2x16x16xf32> to vector<1xf32>
    %42 = vector.shape_cast %41 : vector<1xf32> to vector<1x1x1x1xf32>
    %43 = vector.extract %42[0, 0, 0, 0] : f32 from vector<1x1x1x1xf32>
    %44 = vector.broadcast %43 : f32 to vector<1x1xf32>
    %45 = arith.addf %29, %44 : vector<1x1xf32>
    %c0_28 = arith.constant 0 : index
    %c0_29 = arith.constant 0 : index
    %46 = vector.load %arg5[%c0_28, %c0_29] : memref<1x1xf32, #tpu.memory_space<vmem>>, vector<1x1xf32>
    tpu.vector_store %arg5[%c0_28, %c0_29], %45 {strides = array<i32>} : memref<1x1xf32, #tpu.memory_space<vmem>>, vector<1x1xf32>,
    %47 = arith.mulf %6, %8 : vector<2x16x16xf32>
    %48 = arith.divf %47, %10 : vector<2x16x16xf32>
    %49 = arith.subf %48, %4 : vector<2x16x16xf32>
    %c0_30 = arith.constant 0 : index
    %c0_31 = arith.constant 0 : index
    %50 = vector.load %arg6[%c0_30, %c0_31] : memref<1x1xf32, #tpu.memory_space<vmem>>, vector<1x1xf32>
    %51 = arith.mulf %49, %49 : vector<2x16x16xf32>
    %52 = vector.shape_cast %51 : vector<2x16x16xf32> to vector<1x2x16x16xf32>
    %cst_32 = arith.constant dense<0.000000e+00> : vector<1xf32>
    %53 = vector.multi_reduction <add>, %52, %cst_32 [1, 2, 3] : vector<1x2x16x16xf32> to vector<1xf32>
    %54 = vector.shape_cast %53 : vector<1xf32> to vector<1x1x1x1xf32>
    %55 = vector.extract %54[0, 0, 0, 0] : f32 from vector<1x1x1x1xf32>
    %56 = vector.broadcast %55 : f32 to vector<1x1xf32>
    %57 = arith.addf %50, %56 : vector<1x1xf32>
    %c0_33 = arith.constant 0 : index
    %c0_34 = arith.constant 0 : index
    %58 = vector.load %arg6[%c0_33, %c0_34] : memref<1x1xf32, #tpu.memory_space<vmem>>, vector<1x1xf32>
    tpu.vector_store %arg6[%c0_33, %c0_34], %57 {strides = array<i32>} : memref<1x1xf32, #tpu.memory_space<vmem>>, vector<1x1xf32>,
    %c0_i32_35 = arith.constant 0 : i32
    %59 = arith.cmpi eq, %arg0, %c0_i32_35 : i32
    %60 = arith.extui %59 : i1 to i32
    %c0_i32_36 = arith.constant 0 : i32
    %61 = arith.cmpi ne, %60, %c0_i32_36 : i32
    scf.if %61 {
      %cst_37 = arith.constant 1.000000e+00 : f32
      %cst_38 = arith.constant 5.120000e+02 : f32
      %62 = arith.divf %cst_37, %cst_38 : f32
      %c0_39 = arith.constant 0 : index
      %c0_40 = arith.constant 0 : index
      %63 = vector.load %arg4[%c0_39, %c0_40] : memref<1x1xf32, #tpu.memory_space<vmem>>, vector<1x1xf32>
      %64 = vector.broadcast %62 : f32 to vector<1x1xf32>
      %65 = arith.mulf %63, %64 : vector<1x1xf32>
      %c0_41 = arith.constant 0 : index
      %c0_42 = arith.constant 0 : index
      %66 = vector.load %arg5[%c0_41, %c0_42] : memref<1x1xf32, #tpu.memory_space<vmem>>, vector<1x1xf32>
      %67 = vector.broadcast %62 : f32 to vector<1x1xf32>
      %68 = arith.mulf %66, %67 : vector<1x1xf32>
      %c0_43 = arith.constant 0 : index
      %c0_44 = arith.constant 0 : index
      %69 = vector.load %arg6[%c0_43, %c0_44] : memref<1x1xf32, #tpu.memory_space<vmem>>, vector<1x1xf32>
      %70 = vector.broadcast %62 : f32 to vector<1x1xf32>
      %71 = arith.mulf %69, %70 : vector<1x1xf32>
      %cst_45 = arith.constant 5.000000e-01 : f32
      %72 = vector.broadcast %cst_45 : f32 to vector<1x1xf32>
      %73 = arith.mulf %65, %72 : vector<1x1xf32>
      %cst_46 = arith.constant 3.000000e-01 : f32
      %74 = vector.broadcast %cst_46 : f32 to vector<1x1xf32>
      %75 = arith.mulf %68, %74 : vector<1x1xf32>
      %76 = arith.addf %73, %75 : vector<1x1xf32>
      %cst_47 = arith.constant 2.000000e-01 : f32
      %77 = vector.broadcast %cst_47 : f32 to vector<1x1xf32>
      %78 = arith.mulf %71, %77 : vector<1x1xf32>
      %79 = arith.addf %76, %78 : vector<1x1xf32>
      %c0_48 = arith.constant 0 : index
      %c0_49 = arith.constant 0 : index
      %80 = vector.load %arg3[%c0_48, %c0_49] : memref<1x1xf32, #tpu.memory_space<vmem>>, vector<1x1xf32>
      tpu.vector_store %arg3[%c0_48, %c0_49], %79 {strides = array<i32>} : memref<1x1xf32, #tpu.memory_space<vmem>>, vector<1x1xf32>,
    } else {
    }
    return
  }
  func.func @transform_0(%arg0: i32) -> (i32, i32, i32, i32) {
    %c0_i32 = arith.constant 0 : i32
    %c0_i32_0 = arith.constant 0 : i32
    %c0_i32_1 = arith.constant 0 : i32
    %c0_i32_2 = arith.constant 0 : i32
    return %arg0, %c0_i32, %c0_i32_0, %c0_i32_1 : i32, i32, i32, i32
  }
  func.func @transform_1(%arg0: i32) -> (i32, i32, i32, i32) {
    %c0_i32 = arith.constant 0 : i32
    %c0_i32_0 = arith.constant 0 : i32
    %c0_i32_1 = arith.constant 0 : i32
    %c0_i32_2 = arith.constant 0 : i32
    return %arg0, %c0_i32, %c0_i32_0, %c0_i32_1 : i32, i32, i32, i32
  }
  func.func @transform_2(%arg0: i32) -> (i32, i32) {
    %c0_i32 = arith.constant 0 : i32
    %c0_i32_0 = arith.constant 0 : i32
    %c0_i32_1 = arith.constant 0 : i32
    return %c0_i32, %c0_i32_0 : i32, i32
  }
}

</mosaic_0001>

<llo_original>
// kernel: tpu_custom_call.1
$region0: #{tpu_custom_call.1}
  #allocation0 [shape = 'u32[]', space=smem, size = 0x4, offset = 0x4, fixed_abs, tag = 'smem constant byte address 0x4 - core index']
  #allocation1 [shape = 'u32[144,128]{1,0:T(1,128)}', space=vmem, size = 0x12000, scoped, tag = 'internal scratch']
  #allocation2 [shape = 'f32[1,1]{1,0:T(1,128)}', space=vmem, size = 0x200, scoped, tag = 'scratch operand']
  #allocation3 [shape = 'f32[1,1]{1,0:T(1,128)}', space=vmem, size = 0x200, scoped, tag = 'scratch operand']
  #allocation4 [shape = 'f32[1,1]{1,0:T(1,128)}', space=vmem, size = 0x200, scoped, tag = 'scratch operand']
  %s0 = inlined_call_operand.hbm [shape: f32[2,2,16,16], index: 0, kind: input, shape index: {}]
  %s1 = inlined_call_operand.hbm [shape: f32[2,2,16,16], index: 1, kind: input, shape index: {}]
  %s2 = inlined_call_operand.hbm [shape: f32[1,1], index: 2, kind: output, shape index: {}]
  %s3 = sld [smem:[#allocation0]]
  $region34: #{tpu_custom_call.1} parent=0
    _
  %s5 = ssub.s32 1, %s3
  %s6 = scalar_select 0, %s5, %s3
  $region1: #{tpu_custom_call.1} parent=0
    #allocation5 [shape = 'u8[32768]{0}', space=vmem, size = 0x8000, scoped, tag = 'input window, operand 0, single buffered']
    #allocation6 [shape = 's32[1]{0}', space=sflag, size = 0x4, scoped, tag = 'scoped memory for tpu_custom_call.1']
    #allocation7 [shape = 's32[1]{0}', space=sflag, size = 0x4, scoped, tag = 'scoped memory for tpu_custom_call.1']
    #allocation8 [shape = 'u8[32768]{0}', space=vmem, size = 0x8000, scoped, tag = 'input window, operand 1, single buffered']
    #allocation9 [shape = 's32[1]{0}', space=sflag, size = 0x4, scoped, tag = 'scoped memory for tpu_custom_call.1']
    #allocation10 [shape = 'u8[512]{0}', space=vmem, size = 0x400, scoped, tag = 'output window, operand 0, single buffered']
    %7 = vsyncpa [#allocation6], 0
    %8 = vsyncpa [#allocation9], 0
    %9 = vsyncpa [#allocation7], 0
    // Predicated region
    $region2: #{tpu_custom_call.1} parent=1 // pred_check
      _
    $region3: #{tpu_custom_call.1} parent=1 // pred_check_branch
      %11 = sbr.rel (0) target = $region5
    $region4: #{tpu_custom_call.1} parent=1 // pred_region
      %s13 = ssub.s32 1024, 1024
      %14 = vsyncadd [#allocation6], %s13
      %s15 = sshll.u32 [#allocation5], 4
      %s16 = int_to_ptr.vmem [resolvable:$true] %s15
      %21 = dma.hbm_to_vmem [thread:$0]  %s0, 1024, %s16, [#allocation6], 128, 128, 8
    $region5: #{tpu_custom_call.1} parent=1 // pred_fallthru
      _
    // Predicated region
    $region6: #{tpu_custom_call.1} parent=1 // pred_check
      _
    $region7: #{tpu_custom_call.1} parent=1 // pred_check_branch
      %23 = sbr.rel (0) target = $region9
    $region8: #{tpu_custom_call.1} parent=1 // pred_region
      %s25 = ssub.s32 1024, 1024
      %26 = vsyncadd [#allocation9], %s25
      %s27 = sshll.u32 [#allocation8], 4
      %s28 = int_to_ptr.vmem [resolvable:$true] %s27
      %33 = dma.hbm_to_vmem [thread:$0]  %s1, 1024, %s28, [#allocation9], 128, 128, 8
    $region9: #{tpu_custom_call.1} parent=1 // pred_fallthru
      _
    // Predicated region
    $region10: #{tpu_custom_call.1} parent=1 // pred_check
      _
    $region11: #{tpu_custom_call.1} parent=1 // pred_check_branch
      %35 = sbr.rel (0) target = $region13
    $region12: #{tpu_custom_call.1} parent=1 // pred_region
      %36 = dma.done [#allocation6], 1024
    $region13: #{tpu_custom_call.1} parent=1 // pred_fallthru
      _
    // Predicated region
    $region14: #{tpu_custom_call.1} parent=1 // pred_check
      _
    $region15: #{tpu_custom_call.1} parent=1 // pred_check_branch
      %38 = sbr.rel (0) target = $region17
    $region16: #{tpu_custom_call.1} parent=1 // pred_region
      %39 = dma.done [#allocation9], 1024
    $region17: #{tpu_custom_call.1} parent=1 // pred_fallthru
      _
    %p40 = scmp.eq.s32.totalorder 0, 0
    // Predicated region
    $region18: #{tpu_custom_call.1} parent=1 // pred_check
      %p41 = pneg %p40
    $region19: #{tpu_custom_call.1} parent=1 // pred_check_branch
      %43 = sbr.rel (%p41) target = $region21
    $region20: #{tpu_custom_call.1} parent=1 // pred_region
      %vm44 = vcmask 0
      %45 = vst.msk [vmem:[#allocation2] sm:$0x1] %vm44, 0.0
      %46 = vst.msk [vmem:[#allocation3] sm:$0x1] %vm44, 0.0
      %47 = vst.msk [vmem:[#allocation4] sm:$0x1] %vm44, 0.0
    $region21: #{tpu_custom_call.1} parent=1 // pred_fallthru
      _
    %v48 = vld [vmem:[#allocation5] sm:$0xff]
    %v49 = vld [vmem:[#allocation5 + $0x8] sm:$0xff]
    %v50 = vld [vmem:[#allocation5 + $0x20] sm:$0xff]
    %v51 = vld [vmem:[#allocation5 + $0x28] sm:$0xff]
    %s52 = scalar_lea.vmem [#allocation5], 16
    %v53 = vld [vmem:[%s52] sm:$0xff]
    %v54 = vld [vmem:[%s52 + $0x8] sm:$0xff]
    %v55 = vld [vmem:[%s52 + $0x20] sm:$0xff]
    %v56 = vld [vmem:[%s52 + $0x28] sm:$0xff]
    %v57 = vld [vmem:[#allocation8] sm:$0xff]
    %v58 = vld [vmem:[#allocation8 + $0x8] sm:$0xff]
    %v59 = vld [vmem:[#allocation8 + $0x20] sm:$0xff]
    %v60 = vld [vmem:[#allocation8 + $0x28] sm:$0xff]
    %s61 = scalar_lea.vmem [#allocation8], 16
    %v62 = vld [vmem:[%s61] sm:$0xff]
    %v63 = vld [vmem:[%s61 + $0x8] sm:$0xff]
    %v64 = vld [vmem:[%s61 + $0x20] sm:$0xff]
    %v65 = vld [vmem:[%s61 + $0x28] sm:$0xff]
    %v66 = vld [vmem:[#allocation2] sm:$0x1]
    %v67 = vsub.f32 %v48, %v57
    %v68 = vsub.f32 %v49, %v58
    %v69 = vsub.f32 %v50, %v59
    %v70 = vsub.f32 %v51, %v60
    %v71 = vand.u32 2147483647, %v67
    %v72 = vand.u32 2147483647, %v68
    %v73 = vand.u32 2147483647, %v69
    %v74 = vand.u32 2147483647, %v70
    %vm75 = vcmp.lt.f32.partialorder %v71, 1.0
    %vm76 = vcmp.lt.f32.partialorder %v72, 1.0
    %vm77 = vcmp.lt.f32.partialorder %v73, 1.0
    %vm78 = vcmp.lt.f32.partialorder %v74, 1.0
    %v79 = vmul.f32 %v71, 0.5
    %v80 = vmul.f32 %v72, 0.5
    %v81 = vmul.f32 %v73, 0.5
    %v82 = vmul.f32 %v74, 0.5
    %v83 = vmul.f32 %v79, %v71
    %v84 = vmul.f32 %v80, %v72
    %v85 = vmul.f32 %v81, %v73
    %v86 = vmul.f32 %v82, %v74
    %v87 = vsub.f32 %v71, 0.5
    %v88 = vsub.f32 %v72, 0.5
    %v89 = vsub.f32 %v73, 0.5
    %v90 = vsub.f32 %v74, 0.5
    %v91 = vsel %vm75, %v83, %v87
    %v92 = vsel %vm76, %v84, %v88
    %v93 = vsel %vm77, %v85, %v89
    %v94 = vsel %vm78, %v86, %v90
    %vm95 = vcmask 130048
    %v96 = vsel %vm95, %v91, 0.0
    %v97 = vsel %vm95, %v92, 0.0
    %v98 = vadd.f32 %v96, %v97
    %v99 = vsel %vm95, %v93, 0.0
    %v100 = vadd.f32 %v98, %v99
    %v101 = vsel %vm95, %v94, 0.0
    %v102 = vadd.f32 %v100, %v101
    %103 = vadd.xlane.f32.xlu0 %v102
    %v104 = vpop.xlane.xlu0 %103
    %v105 = vrot.slane %v104, 4
    %v106 = vadd.f32 %v104, %v105
    %v107 = vrot.slane %v106, 2
    %v108 = vadd.f32 %v106, %v107
    %v109 = vrot.slane %v108, 1
    %v110 = vadd.f32 %v108, %v109
    %s111 = vtos %v110
    %v112 = vstv %s111
    %v113 = vadd.f32 %v66, %v112
    %vm114 = vcmask 0
    %115 = vst.msk [vmem:[#allocation2] sm:$0x1] %vm114, %v113
    %v116 = vld [vmem:[#allocation3] sm:$0x1]
    %v117 = vsub.f32 %v53, %v62
    %v118 = vsub.f32 %v54, %v63
    %v119 = vsub.f32 %v55, %v64
    %v120 = vsub.f32 %v56, %v65
    %v121 = vand.u32 2147483647, %v117
    %v122 = vand.u32 2147483647, %v118
    %v123 = vand.u32 2147483647, %v119
    %v124 = vand.u32 2147483647, %v120
    %vm125 = vcmp.lt.f32.partialorder %v121, 1.0
    %vm126 = vcmp.lt.f32.partialorder %v122, 1.0
    %vm127 = vcmp.lt.f32.partialorder %v123, 1.0
    %vm128 = vcmp.lt.f32.partialorder %v124, 1.0
    %v129 = vmul.f32 %v121, 0.5
    %v130 = vmul.f32 %v122, 0.5
    %v131 = vmul.f32 %v123, 0.5
    %v132 = vmul.f32 %v124, 0.5
    %v133 = vmul.f32 %v129, %v121
    %v134 = vmul.f32 %v130, %v122
    %v135 = vmul.f32 %v131, %v123
    %v136 = vmul.f32 %v132, %v124
    %v137 = vsub.f32 %v121, 0.5
    %v138 = vsub.f32 %v122, 0.5
    %v139 = vsub.f32 %v123, 0.5
    %v140 = vsub.f32 %v124, 0.5
    %v141 = vsel %vm125, %v133, %v137
    %v142 = vsel %vm126, %v134, %v138
    %v143 = vsel %vm127, %v135, %v139
    %v144 = vsel %vm128, %v136, %v140
    %v145 = vsel %vm95, %v141, 0.0
    %v146 = vsel %vm95, %v142, 0.0
    %v147 = vadd.f32 %v145, %v146
    %v148 = vsel %vm95, %v143, 0.0
    %v149 = vadd.f32 %v147, %v148
    %v150 = vsel %vm95, %v144, 0.0
    %v151 = vadd.f32 %v149, %v150
    %152 = vadd.xlane.f32.xlu0 %v151
    %v153 = vpop.xlane.xlu0 %152
    %v154 = vrot.slane %v153, 4
    %v155 = vadd.f32 %v153, %v154
    %v156 = vrot.slane %v155, 2
    %v157 = vadd.f32 %v155, %v156
    %v158 = vrot.slane %v157, 1
    %v159 = vadd.f32 %v157, %v158
    %s160 = vtos %v159
    %v161 = vstv %s160
    %v162 = vadd.f32 %v116, %v161
    %163 = vst.msk [vmem:[#allocation3] sm:$0x1] %vm114, %v162
    %v164 = vmul.f32 %v53, %v57
    %v165 = vmul.f32 %v54, %v58
    %v166 = vmul.f32 %v55, %v59
    %v167 = vmul.f32 %v56, %v60
    %v168 = vrcp.pop %v62
    %v169 = vmul.f32 %v164, %v168
    %v170 = vrcp.pop %v63
    %v171 = vmul.f32 %v165, %v170
    %v172 = vrcp.pop %v64
    %v173 = vmul.f32 %v166, %v172
    %v174 = vrcp.pop %v65
    %v175 = vmul.f32 %v167, %v174
    %v176 = vsub.f32 %v169, %v48
    %v177 = vsub.f32 %v171, %v49
    %v178 = vsub.f32 %v173, %v50
    %v179 = vsub.f32 %v175, %v51
    %v180 = vld [vmem:[#allocation4] sm:$0x1]
    %v181 = vmul.f32 %v176, %v176
    %v182 = vmul.f32 %v177, %v177
    %v183 = vmul.f32 %v178, %v178
    %v184 = vmul.f32 %v179, %v179
    %v185 = vsel %vm95, %v181, 0.0
    %v186 = vsel %vm95, %v182, 0.0
    %v187 = vadd.f32 %v185, %v186
    %v188 = vsel %vm95, %v183, 0.0
    %v189 = vadd.f32 %v187, %v188
    %v190 = vsel %vm95, %v184, 0.0
    %v191 = vadd.f32 %v189, %v190
    %192 = vadd.xlane.f32.xlu0 %v191
    %v193 = vpop.xlane.xlu0 %192
    %v194 = vrot.slane %v193, 4
    %v195 = vadd.f32 %v193, %v194
    %v196 = vrot.slane %v195, 2
    %v197 = vadd.f32 %v195, %v196
    %v198 = vrot.slane %v197, 1
    %v199 = vadd.f32 %v197, %v198
    %s200 = vtos %v199
    %v201 = vstv %s200
    %v202 = vadd.f32 %v180, %v201
    %203 = vst.msk [vmem:[#allocation4] sm:$0x1] %vm114, %v202
    // Predicated region
    $region22: #{tpu_custom_call.1} parent=1 // pred_check
      %p204 = pneg %p40
    $region23: #{tpu_custom_call.1} parent=1 // pred_check_branch
      %206 = sbr.rel (%p204) target = $region25
    $region24: #{tpu_custom_call.1} parent=1 // pred_region
      %v207 = vld [vmem:[#allocation2] sm:$0x1]
      %v208 = vmul.f32 %v207, 0.001953125
      %v209 = vld [vmem:[#allocation3] sm:$0x1]
      %v210 = vmul.f32 %v209, 0.001953125
      %v211 = vld [vmem:[#allocation4] sm:$0x1]
      %v212 = vmul.f32 %v211, 0.001953125
      %v213 = vmul.f32 %v208, 0.5
      %v214 = vmul.f32 %v210, 0.3
      %v215 = vadd.f32 %v213, %v214
      %v216 = vmul.f32 %v212, 0.2
      %v217 = vadd.f32 %v215, %v216
      %218 = vst.msk [vmem:[#allocation10] sm:$0x1] %vm114, %v217
    $region25: #{tpu_custom_call.1} parent=1 // pred_fallthru
      _
    // Predicated region
    $region26: #{tpu_custom_call.1} parent=1 // pred_check
      _
    $region27: #{tpu_custom_call.1} parent=1 // pred_check_branch
      %220 = sbr.rel (0) target = $region29
    $region28: #{tpu_custom_call.1} parent=1 // pred_region
      %s222 = ssub.s32 16, 16
      %223 = vsyncadd [#allocation7], %s222
      %s225 = sshll.u32 [#allocation10], 4
      %s226 = int_to_ptr.vmem [resolvable:$true] %s225
      %228 = dma.vmem_to_hbm [thread:$0]  %s226, 16, %s2, [#allocation7]
    $region29: #{tpu_custom_call.1} parent=1 // pred_fallthru
      _
    // Predicated region
    $region30: #{tpu_custom_call.1} parent=1 // pred_check
      _
    $region31: #{tpu_custom_call.1} parent=1 // pred_check_branch
      %230 = sbr.rel (0) target = $region33
    $region32: #{tpu_custom_call.1} parent=1 // pred_region
      %231 = dma.done [#allocation7], 16
    $region33: #{tpu_custom_call.1} parent=1 // pred_fallthru
      _
    %232 = vsyncpa [#allocation6], 1
    %233 = vsyncpa [#allocation9], 1
    %234 = vsyncpa [#allocation7], 1

</llo_original>
